<compile_context>
chip_gen: v7x
topology: tpu7x:2x2x1
jax: 0.10.0
libtpu: 0.0.40
codegen_flags: <defaults>
</compile_context>

<pallas_src>
import functools

import jax
import jax.numpy as jnp
from jax.experimental import pallas as pl
from jax.experimental.pallas import tpu as pltpu


# ----------------------------- kernels ------------------------------------ #

def _pe_eval_kernel(pos_ref, x_ref, o_ref):
    # pos_ref: (TR, C) shared across batch; x_ref/o_ref: (1, TR, C)
    o_ref[...] = x_ref[...] + pos_ref[...]


def _pe_train_kernel(pos_ref, x_ref, u_ref, o_ref, *, p):
    # Inverted dropout: keep with prob (1-p), scale kept values by 1/(1-p).
    y = x_ref[...] + pos_ref[...]
    keep = u_ref[...] >= jnp.float32(p)
    scale = jnp.asarray(1.0 / (1.0 - p), dtype=y.dtype)
    o_ref[...] = jnp.where(keep, y * scale, jnp.zeros_like(y))


# ----------------------------- wrapper ------------------------------------ #

def make_pos_embedding(emb_size, max_len, dtype=jnp.float32):
    """Deterministic sin/cos table, identical to the module's __init__."""
    position = jnp.arange(0, max_len, dtype=jnp.float32).reshape(max_len, 1)
    den = jnp.exp(
        jnp.arange(0, emb_size, 2, dtype=jnp.float32)
        * -(jnp.log(jnp.float32(10000.0)) / emb_size)
    )
    pe = jnp.zeros((max_len, emb_size), dtype=jnp.float32)
    pe = pe.at[:, 0::2].set(jnp.sin(position * den))
    pe = pe.at[:, 1::2].set(jnp.cos(position * den))
    return pe[None, :, :].astype(dtype)  # (1, max_len, emb_size)


def _choose_view(S, E, itemsize):
    """Pick a lane-dense 2D view (R, C) of one (S, E) slab and a row tile TR."""
    F = S * E
    C = E
    for cand in (512, 256, 128):           # prefer wide, 128-aligned lane dims
        if F % cand == 0:
            C = cand
            break
    R = F // C
    # Target ~1 MiB per buffer so 3-4 double-buffered streams fit every
    # generation's scoped-VMEM default (16 MiB v5e, 32 MiB v6e/v7x).
    target_rows = max(8, (1 << 20) // max(1, C * itemsize))
    if R <= 8:
        TR = R                              # full-dim block is always legal
    else:
        TR = min(R, target_rows)
        TR = max(8, (TR // 8) * 8)          # multiple of 8 (sublane tiling)
    return R, C, TR


def positional_encoding(x, pos, *, p=0.1, training=False, dropout_key=None):
    """x: (B, S, E) token embeddings; pos: (1, max_len, E) buffer."""
    B, S, E = x.shape
    assert pos.ndim == 3 and pos.shape[0] == 1 and pos.shape[2] == E
    # Mirrors the module's own slicing/broadcast behaviour (see header).
    assert pos.shape[1] == S, (
        "pos_embdding[:token_len, :] + x only broadcasts when max_len == seq_len"
    )

    itemsize = jnp.dtype(x.dtype).itemsize
    R, C, TR = _choose_view(S, E, itemsize)
    nblk = pl.cdiv(R, TR)

    xv = x.reshape(B, R, C)        # lane-dense per-batch view
    pv = pos.reshape(R, C)         # shared positional slab, same view

    x_spec = pl.BlockSpec((1, TR, C), lambda b, r: (b, r, 0))
    pos_spec = pl.BlockSpec((TR, C), lambda b, r: (r, 0))
    out_spec = pl.BlockSpec((1, TR, C), lambda b, r: (b, r, 0))

    cparams = pltpu.CompilerParams(
        dimension_semantics=("parallel", "parallel"),
    )

    if training and p > 0.0:
        if dropout_key is None:
            dropout_key = jax.random.PRNGKey(0)
        u = jax.random.uniform(dropout_key, (B, S, E), dtype=jnp.float32)
        u = u.reshape(B, R, C)
        kernel = functools.partial(_pe_train_kernel, p=float(p))
        out = pl.pallas_call(
            kernel,
            out_shape=jax.ShapeDtypeStruct((B, R, C), x.dtype),
            grid=(B, nblk),
            in_specs=[pos_spec, x_spec, x_spec],   # u shares x's tiling
            out_specs=out_spec,
            compiler_params=cparams,
        )(pv, xv, u)
    else:
        out = pl.pallas_call(
            _pe_eval_kernel,
            out_shape=jax.ShapeDtypeStruct((B, R, C), x.dtype),
            grid=(B, nblk),
            in_specs=[pos_spec, x_spec],
            out_specs=out_spec,
            compiler_params=cparams,
        )(pv, xv)

    return out.reshape(B, S, E)


# ------------------------------ demo / test -------------------------------- #

if __name__ == "__main__":
    # Small shapes implied by the forward: (batch, seq, emb) with max_len == seq
    # (required by the module's own slicing/broadcast behaviour).
    B, S, E = 2, 8, 32
    dropout_p = 0.1

    key = jax.random.PRNGKey(0)
    kx, kd = jax.random.split(key)
    x = jax.random.normal(kx, (B, S, E), dtype=jnp.float32)
    pos = make_pos_embedding(E, S, dtype=jnp.float32)

    # Eval mode (dropout = identity): deterministic check.
    out = jax.block_until_ready(
        positional_encoding(x, pos, p=dropout_p, training=False)
    )
    ref = pos + x   # exactly what pos_embdding[:S, :] + x does when max_len == S
    assert out.shape == (B, S, E)
    assert jnp.allclose(out, ref, atol=1e-6), "eval-mode mismatch vs reference"

    # Training mode (inverted dropout with host-generated uniforms): check
    # against a pure-JAX reference built from the same uniforms.
    out_tr = jax.block_until_ready(
        positional_encoding(x, pos, p=dropout_p, training=True, dropout_key=kd)
    )
    u = jax.random.uniform(kd, (B, S, E), dtype=jnp.float32)
    ref_tr = jnp.where(u >= dropout_p, (x + pos) * (1.0 / (1.0 - dropout_p)), 0.0)
    assert out_tr.shape == (B, S, E)
    assert jnp.allclose(out_tr, ref_tr, atol=1e-5), "train-mode mismatch vs reference"

    print("KERNEL_OK")
</pallas_src>

<mosaic_0001>
module attributes {stable_mosaic.version = 11 : i64} {
  func.func @_pe_eval_kernel(%arg0: i32, %arg1: i32, %arg2: memref<1x256xf32, #tpu.memory_space<vmem>>, %arg3: memref<1x1x256xf32, #tpu.memory_space<vmem>>, %arg4: memref<1x1x256xf32, #tpu.memory_space<vmem>>) attributes {dimension_semantics = [#tpu.dimension_semantics<parallel>, #tpu.dimension_semantics<parallel>], iteration_bounds = array<i64: 2, 1>, scalar_prefetch = 0 : i64, scratch_operands = 0 : i64, tpu.core_type = #tpu.core_type<tc>, window_params = [{transform_indices = @transform_0, window_bounds = array<i64: 1, 256>}, {transform_indices = @transform_1, window_bounds = array<i64: 1, 1, 256>}, {transform_indices = @transform_2, window_bounds = array<i64: 1, 1, 256>}]} {
    %c0 = arith.constant 0 : index
    %c0_0 = arith.constant 0 : index
    %c0_1 = arith.constant 0 : index
    %0 = vector.load %arg3[%c0, %c0_0, %c0_1] : memref<1x1x256xf32, #tpu.memory_space<vmem>>, vector<1x1x256xf32>
    %c0_2 = arith.constant 0 : index
    %c0_3 = arith.constant 0 : index
    %1 = vector.load %arg2[%c0_2, %c0_3] : memref<1x256xf32, #tpu.memory_space<vmem>>, vector<1x256xf32>
    %2 = vector.shape_cast %1 : vector<1x256xf32> to vector<1x1x256xf32>
    %3 = arith.addf %0, %2 : vector<1x1x256xf32>
    %c0_4 = arith.constant 0 : index
    %c0_5 = arith.constant 0 : index
    %c0_6 = arith.constant 0 : index
    %4 = vector.load %arg4[%c0_4, %c0_5, %c0_6] : memref<1x1x256xf32, #tpu.memory_space<vmem>>, vector<1x1x256xf32>
    tpu.vector_store %arg4[%c0_4, %c0_5, %c0_6], %3 {strides = array<i32>} : memref<1x1x256xf32, #tpu.memory_space<vmem>>, vector<1x1x256xf32>,
    return
  }
  func.func @transform_0(%arg0: i32, %arg1: i32) -> (i32, i32) {
    %c0_i32 = arith.constant 0 : i32
    %c0_i32_0 = arith.constant 0 : i32
    return %arg1, %c0_i32 : i32, i32
  }
  func.func @transform_1(%arg0: i32, %arg1: i32) -> (i32, i32, i32) {
    %c0_i32 = arith.constant 0 : i32
    %c0_i32_0 = arith.constant 0 : i32
    return %arg0, %arg1, %c0_i32 : i32, i32, i32
  }
  func.func @transform_2(%arg0: i32, %arg1: i32) -> (i32, i32, i32) {
    %c0_i32 = arith.constant 0 : i32
    %c0_i32_0 = arith.constant 0 : i32
    return %arg0, %arg1, %c0_i32 : i32, i32, i32
  }
}

</mosaic_0001>

<llo_original>
// kernel: tpu_custom_call.1
$region0: #{tpu_custom_call.1}
  #allocation0 [shape = 'u32[]', space=smem, size = 0x4, offset = 0x4, fixed_abs, tag = 'smem constant byte address 0x4 - core index']
  #allocation1 [shape = 'u32[144,128]{1,0:T(1,128)}', space=vmem, size = 0x12000, scoped, tag = 'internal scratch']
  %s0 = inlined_call_operand.hbm [shape: f32[1,256], index: 0, kind: input, shape index: {}]
  %s1 = inlined_call_operand.hbm [shape: f32[2,1,256], index: 1, kind: input, shape index: {}]
  %s2 = inlined_call_operand.hbm [shape: f32[2,1,256], index: 2, kind: output, shape index: {}]
  %s3 = sld [smem:[#allocation0]]
  $region49: #{tpu_custom_call.1} parent=0
    _
  %s5 = ssub.s32 1, %s3
  %s6 = scalar_select 0, %s5, %s3
  $region1: #{tpu_custom_call.1} parent=0
    #allocation2 [shape = 'u8[1024]{0}', space=vmem, size = 0x400, scoped, tag = 'input window, operand 0, single buffered']
    #allocation3 [shape = 's32[2]{0}', space=sflag, size = 0x8, scoped, tag = 'scoped memory for tpu_custom_call.1']
    #allocation4 [shape = 's32[2]{0}', space=sflag, size = 0x8, scoped, tag = 'scoped memory for tpu_custom_call.1']
    #allocation5 [shape = 'u8[2048]{0}', space=vmem, size = 0x800, scoped, tag = 'input window, operand 1']
    #allocation6 [shape = 's32[2]{0}', space=sflag, size = 0x8, scoped, tag = 'scoped memory for tpu_custom_call.1']
    #allocation7 [shape = 'u8[2048]{0}', space=vmem, size = 0x800, scoped, tag = 'output window, operand 0']
    %7 = vsyncpa [#allocation3], 0
    %8 = vsyncpa [#allocation6], 0
    %s9 = scalar_lea.sflag [#allocation6], 1
    %10 = vsyncpa %s9, 0
    %11 = vsyncpa [#allocation4], 0
    %s12 = scalar_lea.sflag [#allocation4], 1
    %13 = vsyncpa %s12, 0
    loop: start=0, step=1, limit=4
    $region2: #{tpu_custom_call.1} parent=1 // loop_pre_header
      _
    $region3: #{tpu_custom_call.1} parent=1 // loop_header
      %s15 = sphi 0, %s19
      %p16 = scmp.ge.s32.totalorder %s15, 4
      %s22 = sphi 0, %s34
      %s23 = sphi 0, %s30
      %s24 = sphi 0, %s22
      %s25 = sphi 0, %s23
      %s26 = sphi 0, %s24
      %s27 = sphi 0, %s25
      %s37 = sphi 0, %s39
      %s40 = sphi 0, %s37
      %s41 = sphi 0, %s40
      %s57 = sphi 0, %s41
      %s65 = sphi 0, %s67
      %s68 = sphi 0, %s65
      %s69 = sphi 0, %s68
      %s85 = sphi 0, %s69
      %s93 = sphi 0, %s95
      %s96 = sphi 0, %s93
      %s97 = sphi 0, %s96
      %s113 = sphi 0, %s97
    $region4: #{tpu_custom_call.1} parent=1 // loop_header_branch
      %18 = sbr.rel (%p16) target = $region8
    $region5: #{tpu_custom_call.1} parent=1 // loop_body
      %s20 = ssub.s32 %s15, 1
      %s21 = ssub.s32 %s15, 2
      %s28 = sadd.s32 1, %s23
      %p29 = scmp.ge.s32.totalorder %s28, 1
      %s30 = scalar_select %p29, 0, %s28
      %s31 = sadd.s32 1, %s22
      %s32 = scalar_select %p29, %s31, %s22
      %p33 = scmp.ge.s32.totalorder %s32, 2
      %s34 = scalar_select %p33, 0, %s32
      %s35 = ssub.s32 %s23, %s30
      %p36 = scmp.eq.s32.totalorder %s35, 0
      %s38 = sadd.s32 %s37, 1
      %s39 = scalar_select %p36, %s37, %s38
      %p42 = pneg %p36
      %p43 = scmp.eq.s32.totalorder %s15, 1
      %p44 = por %p42, %p43
      %p45 = scmp.ne.s32.totalorder %s37, %s40
      %p46 = scmp.eq.s32.totalorder %s15, 0
      %p47 = por %p45, %p46
      %p48 = scmp.ne.s32.totalorder %s37, %s40
      %p49 = scmp.eq.s32.totalorder %s20, 1
      %p50 = por %p48, %p49
      %p51 = scmp.ne.s32.totalorder %s40, %s41
      %p52 = scmp.eq.s32.totalorder %s20, 0
      %p53 = por %p51, %p52
      %p54 = scmp.ne.s32.totalorder %s40, %s41
      %p55 = scmp.eq.s32.totalorder %s21, 1
      %p56 = por %p54, %p55
      %p58 = scmp.ne.s32.totalorder %s41, %s57
      %p59 = scmp.eq.s32.totalorder %s21, 0
      %p60 = por %p58, %p59
      %s61 = ssub.s32 %s22, %s34
      %s62 = ssub.s32 %s23, %s30
      %s63 = sor.u32 %s61, %s62
      %p64 = scmp.eq.s32.totalorder %s63, 0
      %s66 = sadd.s32 %s65, 1
      %s67 = scalar_select %p64, %s65, %s66
      %p70 = pneg %p64
      %p71 = scmp.eq.s32.totalorder %s15, 1
      %p72 = por %p70, %p71
      %p73 = scmp.ne.s32.totalorder %s65, %s68
      %p74 = scmp.eq.s32.totalorder %s15, 0
      %p75 = por %p73, %p74
      %p76 = scmp.ne.s32.totalorder %s65, %s68
      %p77 = scmp.eq.s32.totalorder %s20, 1
      %p78 = por %p76, %p77
      %p79 = scmp.ne.s32.totalorder %s68, %s69
      %p80 = scmp.eq.s32.totalorder %s20, 0
      %p81 = por %p79, %p80
      %p82 = scmp.ne.s32.totalorder %s68, %s69
      %p83 = scmp.eq.s32.totalorder %s21, 1
      %p84 = por %p82, %p83
      %p86 = scmp.ne.s32.totalorder %s69, %s85
      %p87 = scmp.eq.s32.totalorder %s21, 0
      %p88 = por %p86, %p87
      %s89 = ssub.s32 %s22, %s34
      %s90 = ssub.s32 %s23, %s30
      %s91 = sor.u32 %s89, %s90
      %p92 = scmp.eq.s32.totalorder %s91, 0
      %s94 = sadd.s32 %s93, 1
      %s95 = scalar_select %p92, %s93, %s94
      %p98 = pneg %p92
      %p99 = scmp.eq.s32.totalorder %s15, 1
      %p100 = por %p98, %p99
      %p101 = scmp.ne.s32.totalorder %s93, %s96
      %p102 = scmp.eq.s32.totalorder %s15, 0
      %p103 = por %p101, %p102
      %p104 = scmp.ne.s32.totalorder %s93, %s96
      %p105 = scmp.eq.s32.totalorder %s20, 1
      %p106 = por %p104, %p105
      %p107 = scmp.ne.s32.totalorder %s96, %s97
      %p108 = scmp.eq.s32.totalorder %s20, 0
      %p109 = por %p107, %p108
      %p110 = scmp.ne.s32.totalorder %s96, %s97
      %p111 = scmp.eq.s32.totalorder %s21, 1
      %p112 = por %p110, %p111
      %p114 = scmp.ne.s32.totalorder %s97, %s113
      %p115 = scmp.eq.s32.totalorder %s21, 0
      %p116 = por %p114, %p115
      %p117 = scmp.le.s32.totalorder 1, %s15
      %p118 = scmp.lt.s32.totalorder %s15, 3
      %p119 = pnand %p117, %p118
      %p120 = pneg %p119
      // Predicated region
      $region9: #{tpu_custom_call.1} parent=5 // pred_check
        _
      $region10: #{tpu_custom_call.1} parent=5 // pred_check_branch
        %122 = sbr.rel (%p119) target = $region12
      $region11: #{tpu_custom_call.1} parent=5 // pred_region
        %s123 = ssub.s32 %s15, 1
        // Predicated region
        $region13: #{tpu_custom_call.1} parent=11 // pred_check
          %p124 = pneg %p53
        $region14: #{tpu_custom_call.1} parent=11 // pred_check_branch
          %126 = sbr.rel (%p124) target = $region16
        $region15: #{tpu_custom_call.1} parent=11 // pred_region
          %s128 = ssub.s32 32, 32
          %129 = vsyncadd [#allocation3], %s128
          %s130 = smul.addr %s25, 2
          %s131 = smul.addr %s130, 16
          %s132 = scalar_lea.hbm %s0, %s131
          %s134 = sshll.u32 [#allocation2], 4
          %s135 = int_to_ptr.vmem [resolvable:$true] %s134
          %137 = dma.hbm_to_vmem [thread:$0]  %s132, 32, %s135, [#allocation3]
        $region16: #{tpu_custom_call.1} parent=11 // pred_fallthru
          _
      $region12: #{tpu_custom_call.1} parent=5 // pred_fallthru
        _
      %p138 = scmp.lt.s32.totalorder %s15, 2
      // Predicated region
      $region17: #{tpu_custom_call.1} parent=5 // pred_check
        %p139 = pneg %p138
      $region18: #{tpu_custom_call.1} parent=5 // pred_check_branch
        %141 = sbr.rel (%p139) target = $region20
      $region19: #{tpu_custom_call.1} parent=5 // pred_region
        // Predicated region
        $region21: #{tpu_custom_call.1} parent=19 // pred_check
          %p142 = pneg %p75
        $region22: #{tpu_custom_call.1} parent=19 // pred_check_branch
          %144 = sbr.rel (%p142) target = $region24
        $region23: #{tpu_custom_call.1} parent=19 // pred_region
          %s145 = sand.u32 %s65, 1
          %s146 = scalar_lea.sflag [#allocation6], %s145
          %s147 = sand.u32 %s65, 1
          %s148 = smul.addr %s147, 2
          %s149 = scalar_lea.vmem [#allocation5], %s148
          %s151 = ssub.s32 32, 32
          %152 = vsyncadd %s146, %s151
          %s153 = smul.addr %s23, 2
          %s154 = smul.addr %s22, 2
          %s155 = sadd.s32 %s153, %s154
          %s156 = smul.addr %s155, 16
          %s157 = scalar_lea.hbm %s1, %s156
          %s159 = sshll.u32 %s149, 4
          %s160 = int_to_ptr.vmem [resolvable:$true] %s159
          %162 = dma.hbm_to_vmem [thread:$0]  %s157, 32, %s160, %s146
        $region24: #{tpu_custom_call.1} parent=19 // pred_fallthru
          _
      $region20: #{tpu_custom_call.1} parent=5 // pred_fallthru
        _
      %p163 = scmp.le.s32.totalorder 1, %s15
      %p164 = scmp.lt.s32.totalorder %s15, 3
      %p165 = pnand %p163, %p164
      %p166 = pneg %p165
      // Predicated region
      $region25: #{tpu_custom_call.1} parent=5 // pred_check
        _
      $region26: #{tpu_custom_call.1} parent=5 // pred_check_branch
        %168 = sbr.rel (%p165) target = $region28
      $region27: #{tpu_custom_call.1} parent=5 // pred_region
        %s169 = ssub.s32 %s15, 1
        // Predicated region
        $region29: #{tpu_custom_call.1} parent=27 // pred_check
          %p170 = pneg %p53
        $region30: #{tpu_custom_call.1} parent=27 // pred_check_branch
          %172 = sbr.rel (%p170) target = $region32
        $region31: #{tpu_custom_call.1} parent=27 // pred_region
          %173 = dma.done [#allocation3], 32
        $region32: #{tpu_custom_call.1} parent=27 // pred_fallthru
          _
        %s174 = sand.u32 %s68, 1
        %s175 = scalar_lea.sflag [#allocation6], %s174
        %s176 = sand.u32 %s68, 1
        %s177 = smul.addr %s176, 2
        %s178 = scalar_lea.vmem [#allocation5], %s177
        // Predicated region
        $region33: #{tpu_custom_call.1} parent=27 // pred_check
          %p179 = pneg %p81
        $region34: #{tpu_custom_call.1} parent=27 // pred_check_branch
          %181 = sbr.rel (%p179) target = $region36
        $region35: #{tpu_custom_call.1} parent=27 // pred_region
          %182 = dma.done %s175, 32
        $region36: #{tpu_custom_call.1} parent=27 // pred_fallthru
          _
        %p183 = pneg %p53
        %p184 = pneg %p50
        %s185 = sand.u32 %s68, 1
        %s186 = scalar_lea.sflag [#allocation6], %s185
        %s187 = sand.u32 %s68, 1
        %s188 = smul.addr %s187, 2
        %s189 = scalar_lea.vmem [#allocation5], %s188
        %p190 = pneg %p81
        %p191 = pneg %p78
        %p192 = pneg %p109
        %p193 = pneg %p106
        %s194 = sand.u32 %s96, 1
        %s195 = scalar_lea.sflag [#allocation4], %s194
        %s196 = sand.u32 %s96, 1
        %s197 = smul.addr %s196, 2
        %s198 = scalar_lea.vmem [#allocation7], %s197
        %v199 = vld [vmem:[%s178] sm:$0x3]
        %v200 = vld [vmem:[#allocation2] sm:$0x3]
        %v201 = vadd.f32 %v199, %v200
        %v202 = vlaneseq
        %vm203 = vcmp.ge.s32.totalorder %v202, 0
        %vm204 = vcmp.lt.s32.totalorder %v202, 256
        %vm205 = vmand %vm203, %vm204
        %206 = vst.msk [vmem:[%s198] sm:$0x3] %vm205, %v201
        %s207 = sand.u32 %s96, 1
        %s208 = scalar_lea.sflag [#allocation4], %s207
        %s209 = sand.u32 %s96, 1
        %s210 = smul.addr %s209, 2
        %s211 = scalar_lea.vmem [#allocation7], %s210
        // Predicated region
        $region37: #{tpu_custom_call.1} parent=27 // pred_check
          %p212 = pneg %p106
        $region38: #{tpu_custom_call.1} parent=27 // pred_check_branch
          %214 = sbr.rel (%p212) target = $region40
        $region39: #{tpu_custom_call.1} parent=27 // pred_region
          %s216 = ssub.s32 32, 32
          %217 = vsyncadd %s208, %s216
          %s218 = smul.addr %s25, 2
          %s219 = smul.addr %s24, 2
          %s220 = sadd.s32 %s218, %s219
          %s221 = smul.addr %s220, 16
          %s222 = scalar_lea.hbm %s2, %s221
          %s224 = sshll.u32 %s211, 4
          %s225 = int_to_ptr.vmem [resolvable:$true] %s224
          %227 = dma.vmem_to_hbm [thread:$0]  %s225, 32, %s222, %s208
        $region40: #{tpu_custom_call.1} parent=27 // pred_fallthru
          _
      $region28: #{tpu_custom_call.1} parent=5 // pred_fallthru
        _
      %p228 = scmp.le.s32.totalorder 2, %s15
      // Predicated region
      $region41: #{tpu_custom_call.1} parent=5 // pred_check
        %p229 = pneg %p228
      $region42: #{tpu_custom_call.1} parent=5 // pred_check_branch
        %231 = sbr.rel (%p229) target = $region44
      $region43: #{tpu_custom_call.1} parent=5 // pred_region
        %s232 = ssub.s32 %s15, 2
        // Predicated region
        $region45: #{tpu_custom_call.1} parent=43 // pred_check
          %p233 = pneg %p112
        $region46: #{tpu_custom_call.1} parent=43 // pred_check_branch
          %235 = sbr.rel (%p233) target = $region48
        $region47: #{tpu_custom_call.1} parent=43 // pred_region
          %s236 = sand.u32 %s97, 1
          %s237 = scalar_lea.sflag [#allocation4], %s236
          %s238 = sand.u32 %s97, 1
          %s239 = smul.addr %s238, 2
          %s240 = scalar_lea.vmem [#allocation7], %s239
          %241 = dma.done %s237, 32
        $region48: #{tpu_custom_call.1} parent=43 // pred_fallthru
          _
      $region44: #{tpu_custom_call.1} parent=5 // pred_fallthru
        _
    $region6: #{tpu_custom_call.1} parent=1 // loop_footer
      %s19 = sadd.s32 1, %s15
    $region7: #{tpu_custom_call.1} parent=1 // loop_footer_branch
      %14 = sbr.rel target = $region3
    $region8: #{tpu_custom_call.1} parent=1 // loop_exit
      _
    %242 = vsyncpa [#allocation3], 1
    %s243 = scalar_lea.sflag [#allocation3], 1
    %244 = vsyncpa %s243, 1
    %245 = vsyncpa [#allocation6], 1
    %s246 = scalar_lea.sflag [#allocation6], 1
    %247 = vsyncpa %s246, 1
    %248 = vsyncpa [#allocation4], 1
    %s249 = scalar_lea.sflag [#allocation4], 1
    %250 = vsyncpa %s249, 1

</llo_original>
